<compile_context>
chip_gen: v6e
topology: v6e:2x2x1
jax: 0.10.0
libtpu: 0.0.40
codegen_flags: <defaults>
</compile_context>

<pallas_src>
import functools

import jax
import jax.numpy as jnp
from jax import lax
from jax.experimental import pallas as pl
from jax.experimental.pallas import tpu as pltpu

# Module hyper-parameters (AsymmetricLoss.__init__ defaults).
GAMMA_NEG = 4.0
GAMMA_POS = 1.0
CLIP = 0.05
EPS = 1e-6


def _int_pow_or_power(base, gamma):
    """base ** gamma.  When gamma is a small non-negative integer (it is for
    the module defaults 1 and 4) use repeated VPU multiplies instead of
    jnp.power, which lowers to exp(gamma*log(.)) -- two EUP transcendentals."""
    g_int = int(gamma)
    if float(g_int) == float(gamma) and 0 <= g_int <= 16:
        if g_int == 0:
            return jnp.ones_like(base)
        result = None
        cur = base
        e = g_int
        while e > 0:
            if e & 1:
                result = cur if result is None else result * cur
            e >>= 1
            if e:
                cur = cur * cur
        return result
    return jnp.power(base, gamma)  # fallback for non-integer gammas


def _asl_elementwise(xs_pos, xs_neg, y, extra_valid):
    """Per-element ASL loss (positive sign), zeroed where the target is -1 or
    `extra_valid` is False (tile-padding rows/cols).

    Assumes binarized targets (y in {-1, 0, 1}, as in the PyTorch module), so
      y*log(p) + (1-y)*log(1-p)   == log(select(y==1, p, 1-p))
      (1-pt)^(gp*y + gn*(1-y))    == select(y==1, (1-pt)^gp, (1-pt)^gn)
    which removes one log and the data-dependent pow per element (EUP -> VPU).
    """
    valid = jnp.logical_and(y != -1.0, extra_valid)
    is_pos = y > 0.5

    if CLIP is not None and CLIP > 0:
        xs_neg = jnp.minimum(xs_neg + CLIP, 1.0)

    p = jnp.where(is_pos, xs_pos, xs_neg)          # == pt (clip applied to neg)
    loss = jnp.log(jnp.maximum(p, EPS))

    if GAMMA_NEG > 0 or GAMMA_POS > 0:
        base = 1.0 - p                              # == 1 - pt
        w = jnp.where(is_pos,
                      _int_pow_or_power(base, GAMMA_POS),
                      _int_pow_or_power(base, GAMMA_NEG))
        loss = loss * w

    return jnp.where(valid, loss, 0.0)              # masked sum contribution


# ---------------------------------------------------------------------------
# 2-D path: sigmoid(x), xs_pos = p, xs_neg = 1 - p.
# Grid = (num_splits, tiles_per_split); the output block (8, C) is a resident
# vector accumulator per split ("arbitrary" axis), summed in the wrapper.
# ---------------------------------------------------------------------------
def _asl_sigmoid_kernel(x_ref, y_ref, acc_ref, *, n_rows, row_tile,
                        tiles_per_split):
    s = pl.program_id(0)
    i = pl.program_id(1)

    @pl.when(i == 0)
    def _():
        acc_ref[...] = jnp.zeros_like(acc_ref)

    x = x_ref[...].astype(jnp.float32)              # (row_tile, C)
    y = y_ref[...].astype(jnp.float32)              # (row_tile, C)

    # Mask rows beyond the true extent (partial last tile).
    row0 = (s * tiles_per_split + i) * row_tile
    rows = row0 + lax.broadcasted_iota(jnp.int32, x.shape, 0)
    row_valid = rows < n_rows

    xs_pos = jax.nn.sigmoid(x)
    xs_neg = 1.0 - xs_pos
    loss = _asl_elementwise(xs_pos, xs_neg, y, row_valid)   # (row_tile, C)

    rt, c = loss.shape
    if rt % 8 == 0:
        # Fold rows in groups of 8 sublanes: pure VPU vreg adds per step.
        acc_ref[...] += jnp.sum(loss.reshape(rt // 8, 8, c), axis=0)
    else:
        # Degenerate small-n case (single full-extent tile): one XLU reduce.
        acc_ref[0:1, :] += jnp.sum(loss, axis=0, keepdims=True)


def asymmetric_loss_sigmoid(x, y, *, vmem_budget_bytes=8 << 20):
    if x.ndim == 1:
        x = x.reshape(1, -1)
    elif x.ndim > 2:
        x = x.reshape(-1, x.shape[-1])
    n, c = x.shape
    y = jnp.reshape(y, (n, c))                       # keep narrow dtype as-is

    # Big row tiles amortize the ~0.35us per-grid-step overhead; shrink to keep
    # double-buffered input tiles within a conservative budget.
    bytes_per_row = c * (x.dtype.itemsize + y.dtype.itemsize)
    row_tile = 512
    while row_tile > 32 and 2 * row_tile * bytes_per_row > vmem_budget_bytes:
        row_tile //= 2
    if n <= row_tile:
        row_tile = n          # full-extent block: always a legal block shape

    tiles = pl.cdiv(n, row_tile)
    # Leading "parallel" axis lets the two v7x TensorCores split the rows
    # (harmless serial iteration on single-core chips).
    num_splits = 2 if (tiles >= 2 and tiles % 2 == 0) else 1
    tiles_per_split = tiles // num_splits

    kernel = functools.partial(
        _asl_sigmoid_kernel,
        n_rows=n, row_tile=row_tile, tiles_per_split=tiles_per_split)

    partial_sums = pl.pallas_call(
        kernel,
        out_shape=jax.ShapeDtypeStruct((num_splits * 8, c), jnp.float32),
        grid=(num_splits, tiles_per_split),
        in_specs=[
            pl.BlockSpec((row_tile, c),
                         lambda s, i: (s * tiles_per_split + i, 0)),
            pl.BlockSpec((row_tile, c),
                         lambda s, i: (s * tiles_per_split + i, 0)),
        ],
        out_specs=pl.BlockSpec((8, c), lambda s, i: (s, 0)),
        compiler_params=pltpu.CompilerParams(
            dimension_semantics=("parallel", "arbitrary")),
    )(x, y)

    # Single tiny cross-lane reduction, done once outside the kernel.
    return -jnp.sum(partial_sums)


# ---------------------------------------------------------------------------
# 3-D path: softmax over the channel axis, channels 0 / 1 = pos / neg probs.
# Wrapper presents a lane-dense (C, B*L) slab; grid tiles the B*L lane axis.
# ---------------------------------------------------------------------------
def _asl_softmax_kernel(x_ref, y_ref, acc_ref, *, n_cols, m_tile):
    i = pl.program_id(0)

    @pl.when(i == 0)
    def _():
        acc_ref[...] = jnp.zeros_like(acc_ref)

    x = x_ref[...].astype(jnp.float32)               # (C, m_tile)
    y = y_ref[...].astype(jnp.float32)               # (1, m_tile)

    cols = i * m_tile + lax.broadcasted_iota(jnp.int32, y.shape, 1)
    col_valid = cols < n_cols

    xm = jnp.max(x, axis=0, keepdims=True)
    e = jnp.exp(x - xm)
    inv_denom = 1.0 / jnp.sum(e, axis=0, keepdims=True)
    xs_pos = e[0:1, :] * inv_denom
    xs_neg = e[1:2, :] * inv_denom

    acc_ref[...] += _asl_elementwise(xs_pos, xs_neg, y, col_valid)


def asymmetric_loss_softmax(x, y, *, vmem_budget_bytes=8 << 20):
    b, c, l = x.shape
    if c < 2:
        raise ValueError("3-D ASL path needs at least 2 channels (pos/neg).")
    m = b * l
    # Lane-dense layout: channels -> sublanes, flattened (B*L) -> lanes.
    xt = jnp.transpose(x, (1, 0, 2)).reshape(c, m)
    yt = jnp.reshape(y, (1, m))

    bytes_per_col = c * xt.dtype.itemsize + yt.dtype.itemsize
    m_tile = 4096
    while m_tile > 128 and 2 * m_tile * bytes_per_col > vmem_budget_bytes:
        m_tile //= 2
    if m <= m_tile:
        m_tile = m            # full-extent block: always a legal block shape

    tiles = pl.cdiv(m, m_tile)
    kernel = functools.partial(_asl_softmax_kernel, n_cols=m, m_tile=m_tile)

    partial_sums = pl.pallas_call(
        kernel,
        out_shape=jax.ShapeDtypeStruct((1, m_tile), jnp.float32),
        grid=(tiles,),
        in_specs=[
            pl.BlockSpec((c, m_tile), lambda i: (0, i)),
            pl.BlockSpec((1, m_tile), lambda i: (0, i)),
        ],
        out_specs=pl.BlockSpec((1, m_tile), lambda i: (0, 0)),
        compiler_params=pltpu.CompilerParams(
            dimension_semantics=("arbitrary",)),
    )(xt, yt)

    return -jnp.sum(partial_sums)


def asymmetric_loss(x, y):
    """Mirrors AsymmetricLoss.forward branching on x.dim()."""
    if x.ndim == 3:
        return asymmetric_loss_softmax(x, y)
    return asymmetric_loss_sigmoid(x, y)


# ---------------------------------------------------------------------------
# Pure-JAX reference: literal translation of the PyTorch forward (two logs,
# data-dependent pow), for verification against the optimized kernel math.
# ---------------------------------------------------------------------------
def reference_loss(x, y):
    xf = jnp.asarray(x, jnp.float32)
    yf = jnp.asarray(y, jnp.float32).reshape(-1)
    if xf.ndim == 3:
        p = jax.nn.softmax(xf, axis=1)
        xs_pos = p[:, 0, :].reshape(-1)
        xs_neg = p[:, 1, :].reshape(-1)
    else:
        xs_pos = jax.nn.sigmoid(xf).reshape(-1)
        xs_neg = 1.0 - xs_pos
    valid = yf != -1.0
    yv = jnp.where(valid, yf, 0.0)
    if CLIP is not None and CLIP > 0:
        xs_neg = jnp.minimum(xs_neg + CLIP, 1.0)
    los_pos = yv * jnp.log(jnp.maximum(xs_pos, EPS))
    los_neg = (1.0 - yv) * jnp.log(jnp.maximum(xs_neg, EPS))
    loss = los_pos + los_neg
    if GAMMA_NEG > 0 or GAMMA_POS > 0:
        pt = xs_pos * yv + xs_neg * (1.0 - yv)
        gamma = GAMMA_POS * yv + GAMMA_NEG * (1.0 - yv)
        loss = loss * jnp.power(1.0 - pt, gamma)
    loss = jnp.where(valid, loss, 0.0)
    return -jnp.sum(loss)


if __name__ == "__main__":
    key = jax.random.PRNGKey(0)
    k1, k2, k3, k4, k5, k6 = jax.random.split(key, 6)

    # 2-D sigmoid path, small (num_samples, num_labels); y as int8 {-1,0,1}.
    x2 = jax.random.normal(k1, (16, 128), jnp.float32)
    y2 = jax.random.randint(k2, (16, 128), -1, 2).astype(jnp.int8)
    got2 = jax.block_until_ready(asymmetric_loss(x2, y2))
    ref2 = jax.block_until_ready(reference_loss(x2, y2))
    assert jnp.allclose(got2, ref2, rtol=1e-3, atol=1e-2), (got2, ref2)

    # 2-D path with ragged rows + multi-tile grid (exercises row masking and
    # the parallel split).
    x2b = jax.random.normal(k3, (1000, 96), jnp.float32)
    y2b = jax.random.randint(k4, (1000, 96), -1, 2).astype(jnp.int8)
    got2b = jax.block_until_ready(asymmetric_loss(x2b, y2b))
    ref2b = jax.block_until_ready(reference_loss(x2b, y2b))
    assert jnp.allclose(got2b, ref2b, rtol=1e-3, atol=1e-2), (got2b, ref2b)

    # 3-D softmax path: (batch, channels, length).
    x3 = jax.random.normal(k5, (2, 4, 16), jnp.float32)
    y3 = jax.random.randint(k6, (2, 16), -1, 2).astype(jnp.int8)
    got3 = jax.block_until_ready(asymmetric_loss(x3, y3))
    ref3 = jax.block_until_ready(reference_loss(x3, y3))
    assert jnp.allclose(got3, ref3, rtol=1e-3, atol=1e-2), (got3, ref3)

    print("KERNEL_OK")
</pallas_src>

<mosaic_0001>
module attributes {stable_mosaic.version = 11 : i64} {
  func.func @_asl_sigmoid_kernel(%arg0: i32, %arg1: i32, %arg2: memref<16x128xf32, #tpu.memory_space<vmem>>, %arg3: memref<16x128xi8, #tpu.memory_space<vmem>>, %arg4: memref<8x128xf32, #tpu.memory_space<vmem>>) attributes {dimension_semantics = [#tpu.dimension_semantics<parallel>, #tpu.dimension_semantics<arbitrary>], iteration_bounds = array<i64: 1, 1>, scalar_prefetch = 0 : i64, scratch_operands = 0 : i64, tpu.core_type = #tpu.core_type<tc>, window_params = [{transform_indices = @transform_0, window_bounds = array<i64: 16, 128>}, {transform_indices = @transform_1, window_bounds = array<i64: 16, 128>}, {transform_indices = @transform_2, window_bounds = array<i64: 8, 128>}]} {
    %c0_i32 = arith.constant 0 : i32
    %0 = arith.cmpi eq, %arg1, %c0_i32 : i32
    %1 = arith.extui %0 : i1 to i32
    %c0_i32_0 = arith.constant 0 : i32
    %2 = arith.cmpi ne, %1, %c0_i32_0 : i32
    scf.if %2 {
      %cst_18 = arith.constant 0.000000e+00 : f32
      %47 = vector.broadcast %cst_18 : f32 to vector<8x128xf32>
      %c0_19 = arith.constant 0 : index
      %c0_20 = arith.constant 0 : index
      %48 = vector.load %arg4[%c0_19, %c0_20] : memref<8x128xf32, #tpu.memory_space<vmem>>, vector<8x128xf32>
      tpu.vector_store %arg4[%c0_19, %c0_20], %47 {strides = array<i32>} : memref<8x128xf32, #tpu.memory_space<vmem>>, vector<8x128xf32>,
    } else {
    }
    %c0 = arith.constant 0 : index
    %c0_1 = arith.constant 0 : index
    %3 = vector.load %arg2[%c0, %c0_1] : memref<16x128xf32, #tpu.memory_space<vmem>>, vector<16x128xf32>
    %c0_2 = arith.constant 0 : index
    %c0_3 = arith.constant 0 : index
    %4 = vector.load %arg3[%c0_2, %c0_3] : memref<16x128xi8, #tpu.memory_space<vmem>>, vector<16x128xi8>
    %5 = arith.sitofp %4 : vector<16x128xi8> to vector<16x128xf32>
    %c1_i32 = arith.constant 1 : i32
    %6 = arith.muli %arg0, %c1_i32 : i32
    %7 = arith.addi %6, %arg1 : i32
    %c16_i32 = arith.constant 16 : i32
    %8 = arith.muli %7, %c16_i32 : i32
    %9 = tpu.iota {dimensions = array<i32: 0>} : vector<16x128xi32>
    %10 = vector.broadcast %8 : i32 to vector<16x128xi32>
    %11 = arith.addi %10, %9 : vector<16x128xi32>
    %c16_i32_4 = arith.constant 16 : i32
    %12 = vector.broadcast %c16_i32_4 : i32 to vector<16x128xi32>
    %13 = arith.cmpi slt, %11, %12 : vector<16x128xi32>
    %14 = arith.negf %3 : vector<16x128xf32>
    %15 = math.exp %14 : vector<16x128xf32>
    %cst = arith.constant 1.000000e+00 : f32
    %16 = vector.broadcast %cst : f32 to vector<16x128xf32>
    %17 = arith.addf %16, %15 : vector<16x128xf32>
    %18 = arith.divf %16, %17 : vector<16x128xf32>
    %cst_5 = arith.constant 1.000000e+00 : f32
    %19 = vector.broadcast %cst_5 : f32 to vector<16x128xf32>
    %20 = arith.subf %19, %18 : vector<16x128xf32>
    %cst_6 = arith.constant -1.000000e+00 : f32
    %21 = vector.broadcast %cst_6 : f32 to vector<16x128xf32>
    %22 = arith.cmpf one, %5, %21 : vector<16x128xf32>
    %23 = arith.andi %22, %13 : vector<16x128xi1>
    %cst_7 = arith.constant 5.000000e-01 : f32
    %24 = vector.broadcast %cst_7 : f32 to vector<16x128xf32>
    %25 = arith.cmpf ogt, %5, %24 : vector<16x128xf32>
    %cst_8 = arith.constant 5.000000e-02 : f32
    %26 = vector.broadcast %cst_8 : f32 to vector<16x128xf32>
    %27 = arith.addf %20, %26 : vector<16x128xf32>
    %cst_9 = arith.constant 1.000000e+00 : f32
    %28 = vector.broadcast %cst_9 : f32 to vector<16x128xf32>
    %29 = arith.minimumf %27, %28 : vector<16x128xf32>
    %30 = arith.select %25, %18, %29 : vector<16x128xi1>, vector<16x128xf32>
    %cst_10 = arith.constant 9.99999997E-7 : f32
    %31 = vector.broadcast %cst_10 : f32 to vector<16x128xf32>
    %32 = arith.maximumf %30, %31 : vector<16x128xf32>
    %33 = math.log %32 : vector<16x128xf32>
    %cst_11 = arith.constant 1.000000e+00 : f32
    %34 = vector.broadcast %cst_11 : f32 to vector<16x128xf32>
    %35 = arith.subf %34, %30 : vector<16x128xf32>
    %36 = arith.mulf %35, %35 : vector<16x128xf32>
    %37 = arith.mulf %36, %36 : vector<16x128xf32>
    %38 = arith.select %25, %35, %37 : vector<16x128xi1>, vector<16x128xf32>
    %39 = arith.mulf %33, %38 : vector<16x128xf32>
    %cst_12 = arith.constant 0.000000e+00 : f32
    %40 = vector.broadcast %cst_12 : f32 to vector<16x128xf32>
    %41 = arith.select %23, %39, %40 : vector<16x128xi1>, vector<16x128xf32>
    %c0_13 = arith.constant 0 : index
    %c0_14 = arith.constant 0 : index
    %42 = vector.load %arg4[%c0_13, %c0_14] : memref<8x128xf32, #tpu.memory_space<vmem>>, vector<8x128xf32>
    %43 = vector.shape_cast %41 : vector<16x128xf32> to vector<2x8x128xf32>
    %cst_15 = arith.constant dense<0.000000e+00> : vector<8x128xf32>
    %44 = vector.multi_reduction <add>, %43, %cst_15 [0] : vector<2x8x128xf32> to vector<8x128xf32>
    %45 = arith.addf %42, %44 : vector<8x128xf32>
    %c0_16 = arith.constant 0 : index
    %c0_17 = arith.constant 0 : index
    %46 = vector.load %arg4[%c0_16, %c0_17] : memref<8x128xf32, #tpu.memory_space<vmem>>, vector<8x128xf32>
    tpu.vector_store %arg4[%c0_16, %c0_17], %45 {strides = array<i32>} : memref<8x128xf32, #tpu.memory_space<vmem>>, vector<8x128xf32>,
    return
  }
  func.func @transform_0(%arg0: i32, %arg1: i32) -> (i32, i32) {
    %c1_i32 = arith.constant 1 : i32
    %0 = arith.muli %arg0, %c1_i32 : i32
    %1 = arith.addi %0, %arg1 : i32
    %c0_i32 = arith.constant 0 : i32
    %c0_i32_0 = arith.constant 0 : i32
    return %1, %c0_i32 : i32, i32
  }
  func.func @transform_1(%arg0: i32, %arg1: i32) -> (i32, i32) {
    %c1_i32 = arith.constant 1 : i32
    %0 = arith.muli %arg0, %c1_i32 : i32
    %1 = arith.addi %0, %arg1 : i32
    %c0_i32 = arith.constant 0 : i32
    %c0_i32_0 = arith.constant 0 : i32
    return %1, %c0_i32 : i32, i32
  }
  func.func @transform_2(%arg0: i32, %arg1: i32) -> (i32, i32) {
    %c0_i32 = arith.constant 0 : i32
    %c0_i32_0 = arith.constant 0 : i32
    return %arg0, %c0_i32 : i32, i32
  }
}

</mosaic_0001>

<llo_original>
// kernel: tpu_custom_call.1
$region0: #{tpu_custom_call.1}
  #allocation0 [shape = 'u32[]', space=smem, size = 0x4, offset = 0x4, fixed_abs, tag = 'smem constant byte address 0x4 - core index']
  #allocation1 [shape = 'u32[144,128]{1,0:T(1,128)}', space=vmem, size = 0x12000, scoped, tag = 'internal scratch']
  %s0 = inlined_call_operand.hbm [shape: f32[16,128], index: 0, kind: input, shape index: {}]
  %s1 = inlined_call_operand.hbm [shape: s8[16,128], index: 1, kind: input, shape index: {}]
  %s2 = inlined_call_operand.hbm [shape: f32[8,128], index: 2, kind: output, shape index: {}]
  %s3 = sld [smem:[#allocation0]]
  $region30: #{tpu_custom_call.1} parent=0
    _
  %s5 = ssub.s32 1, %s3
  %s6 = scalar_select 0, %s5, %s3
  $region1: #{tpu_custom_call.1} parent=0
    #allocation2 [shape = 'u8[8192]{0}', space=vmem, size = 0x2000, scoped, tag = 'input window, operand 0, single buffered']
    #allocation3 [shape = 's32[1]{0}', space=sflag, size = 0x4, scoped, tag = 'scoped memory for tpu_custom_call.1']
    #allocation4 [shape = 's32[1]{0}', space=sflag, size = 0x4, scoped, tag = 'scoped memory for tpu_custom_call.1']
    #allocation5 [shape = 'u8[2048]{0}', space=vmem, size = 0x800, scoped, tag = 'input window, operand 1, single buffered']
    #allocation6 [shape = 's32[1]{0}', space=sflag, size = 0x4, scoped, tag = 'scoped memory for tpu_custom_call.1']
    #allocation7 [shape = 'u8[4096]{0}', space=vmem, size = 0x1000, scoped, tag = 'output window, operand 0, single buffered']
    %7 = vsyncpa [#allocation3], 0
    %8 = vsyncpa [#allocation6], 0
    %9 = vsyncpa [#allocation4], 0
    // Predicated region
    $region2: #{tpu_custom_call.1} parent=1 // pred_check
      _
    $region3: #{tpu_custom_call.1} parent=1 // pred_check_branch
      %11 = sbr.rel (0) target = $region5
    $region4: #{tpu_custom_call.1} parent=1 // pred_region
      %s12 = sadd.s32 0, 0
      %s13 = smul.u32 2, %s12
      %s15 = ssub.s32 256, 256
      %16 = vsyncadd [#allocation3], %s15
      %s17 = smul.addr %s13, 128
      %s18 = scalar_lea.hbm %s0, %s17
      %s19 = sshll.u32 [#allocation2], 4
      %s20 = int_to_ptr.vmem [resolvable:$true] %s19
      %25 = dma.hbm_to_vmem [thread:$0]  %s18, 256, %s20, [#allocation3], 128, 128, 8
    $region5: #{tpu_custom_call.1} parent=1 // pred_fallthru
      _
    // Predicated region
    $region6: #{tpu_custom_call.1} parent=1 // pred_check
      _
    $region7: #{tpu_custom_call.1} parent=1 // pred_check_branch
      %27 = sbr.rel (0) target = $region9
    $region8: #{tpu_custom_call.1} parent=1 // pred_region
      %s28 = sadd.s32 0, 0
      %s29 = smul.u32 2, %s28
      %s31 = ssub.s32 64, 64
      %32 = vsyncadd [#allocation6], %s31
      %s33 = smul.addr %s29, 32
      %s34 = scalar_lea.hbm %s1, %s33
      %s35 = sshll.u32 [#allocation5], 4
      %s36 = int_to_ptr.vmem [resolvable:$true] %s35
      %41 = dma.hbm_to_vmem [thread:$0]  %s34, 64, %s36, [#allocation6], 32, 32, 2
    $region9: #{tpu_custom_call.1} parent=1 // pred_fallthru
      _
    // Predicated region
    $region10: #{tpu_custom_call.1} parent=1 // pred_check
      _
    $region11: #{tpu_custom_call.1} parent=1 // pred_check_branch
      %43 = sbr.rel (0) target = $region13
    $region12: #{tpu_custom_call.1} parent=1 // pred_region
      %44 = dma.done [#allocation3], 256
    $region13: #{tpu_custom_call.1} parent=1 // pred_fallthru
      _
    // Predicated region
    $region14: #{tpu_custom_call.1} parent=1 // pred_check
      _
    $region15: #{tpu_custom_call.1} parent=1 // pred_check_branch
      %46 = sbr.rel (0) target = $region17
    $region16: #{tpu_custom_call.1} parent=1 // pred_region
      %47 = dma.done [#allocation6], 64
    $region17: #{tpu_custom_call.1} parent=1 // pred_fallthru
      _
    %s48 = sadd.s32 0, 0
    %s49 = smul.u32 2, %s48
    %s50 = sadd.s32 0, 0
    %s51 = smul.u32 2, %s50
    %p52 = scmp.eq.s32.totalorder 0, 0
    // Predicated region
    $region18: #{tpu_custom_call.1} parent=1 // pred_check
      %p53 = pneg %p52
    $region19: #{tpu_custom_call.1} parent=1 // pred_check_branch
      %55 = sbr.rel (%p53) target = $region21
    $region20: #{tpu_custom_call.1} parent=1 // pred_region
      %56 = vst [vmem:[#allocation7] sm:$0xff] 0.0
    $region21: #{tpu_custom_call.1} parent=1 // pred_fallthru
      _
    %v57 = vld [vmem:[#allocation2] sm:$0xff]
    %v58 = vld [vmem:[#allocation2 + $0x8] sm:$0xff]
    %v59 = vld [vmem:[#allocation5] sm:$0x3]
    %v60 = vld [vmem:[#allocation5 + $0x2] sm:$0x3]
    %v61 = vunpack.c.0.s8 %v59
    %v62 = vunpack.c.0.s8 %v60
    %v63 = vcvt.s32.f32 %v61
    %v64 = vcvt.s32.f32 %v62
    %s65 = sadd.s32 0, 0
    %s66 = smul.u32 %s65, 16
    %v67 = vlaneseq
    %v68 = vshrl.u32 %v67, 7
    %v69 = vadd.s32 %v68, 8
    %v70 = vstv %s66
    %v71 = vadd.s32 %v70, %v68
    %v72 = vadd.s32 %v70, %v69
    %vm73 = vcmp.lt.s32.totalorder %v71, 16
    %vm74 = vcmp.lt.s32.totalorder %v72, 16
    %v75 = vxor.u32 %v57, 2147483648
    %v76 = vxor.u32 %v58, 2147483648
    %v77 = vmul.f32 %v75, 1.442695
    %v78 = vpow.pop %v77
    %v79 = vmul.f32 %v76, 1.442695
    %v80 = vpow.pop %v79
    %v81 = vadd.f32 %v78, 1.0
    %v82 = vadd.f32 %v80, 1.0
    %v83 = vrcp.pop %v81
    %v84 = vmul.f32 1.0, %v83
    %v85 = vrcp.pop %v82
    %v86 = vmul.f32 1.0, %v85
    %v87 = vsub.f32 1.0, %v84
    %v88 = vsub.f32 1.0, %v86
    %vm89 = vcmp.ne.f32.partialorder %v63, -1.0
    %vm90 = vcmp.ne.f32.partialorder %v64, -1.0
    %vm91 = vmand %vm89, %vm73
    %vm92 = vmand %vm90, %vm74
    %vm93 = vcmp.gt.f32.partialorder %v63, 0.5
    %vm94 = vcmp.gt.f32.partialorder %v64, 0.5
    %v95 = vadd.f32 %v87, 0.05
    %v96 = vadd.f32 %v88, 0.05
    %v97 = vmin.f32 %v95, 1.0
    %v98 = vmin.f32 %v96, 1.0
    %v99 = vsel %vm93, %v84, %v97
    %v100 = vsel %vm94, %v86, %v98
    %v101 = vmax.f32 %v99, 1e-06
    %v102 = vmax.f32 %v100, 1e-06
    %v103 = vlog2.pop %v101
    %v104 = vmul.f32 %v103, 0.6931472
    %v105 = vlog2.pop %v102
    %v106 = vmul.f32 %v105, 0.6931472
    %v107 = vsub.f32 1.0, %v99
    %v108 = vsub.f32 1.0, %v100
    %v109 = vmul.f32 %v107, %v107
    %v110 = vmul.f32 %v108, %v108
    %v111 = vmul.f32 %v109, %v109
    %v112 = vmul.f32 %v110, %v110
    %v113 = vsel %vm93, %v107, %v111
    %v114 = vsel %vm94, %v108, %v112
    %v115 = vmul.f32 %v104, %v113
    %v116 = vmul.f32 %v106, %v114
    %v117 = vsel %vm91, %v115, 0.0
    %v118 = vsel %vm92, %v116, 0.0
    %v119 = vld [vmem:[#allocation7] sm:$0xff]
    %v120 = vadd.f32 %v117, %v118
    %v121 = vadd.f32 %v119, %v120
    %122 = vst [vmem:[#allocation7] sm:$0xff] %v121
    // Predicated region
    $region22: #{tpu_custom_call.1} parent=1 // pred_check
      _
    $region23: #{tpu_custom_call.1} parent=1 // pred_check_branch
      %124 = sbr.rel (0) target = $region25
    $region24: #{tpu_custom_call.1} parent=1 // pred_region
      %s126 = ssub.s32 128, 128
      %127 = vsyncadd [#allocation4], %s126
      %s129 = sshll.u32 [#allocation7], 4
      %s130 = int_to_ptr.vmem [resolvable:$true] %s129
      %132 = dma.vmem_to_hbm [thread:$0]  %s130, 128, %s2, [#allocation4]
    $region25: #{tpu_custom_call.1} parent=1 // pred_fallthru
      _
    // Predicated region
    $region26: #{tpu_custom_call.1} parent=1 // pred_check
      _
    $region27: #{tpu_custom_call.1} parent=1 // pred_check_branch
      %134 = sbr.rel (0) target = $region29
    $region28: #{tpu_custom_call.1} parent=1 // pred_region
      %135 = dma.done [#allocation4], 128
    $region29: #{tpu_custom_call.1} parent=1 // pred_fallthru
      _
    %136 = vsyncpa [#allocation3], 1
    %137 = vsyncpa [#allocation6], 1
    %138 = vsyncpa [#allocation4], 1

</llo_original>
